<compile_context>
chip_gen: v5e
topology: v5e:2x2
jax: 0.10.0
libtpu: 0.0.40
codegen_flags: <defaults>
</compile_context>

<pallas_src>
import jax
import jax.numpy as jnp
from jax.experimental import pallas as pl
from jax.experimental.pallas import tpu as pltpu


def _conv1x1_kernel(w_ref, x_ref, o_ref):
    """w_ref: (C, C) VMEM.  x_ref, o_ref: (1, C, T) VMEM tiles (lanes = pixels)."""
    o_ref[0] = jnp.dot(
        w_ref[...], x_ref[0], preferred_element_type=jnp.float32
    ).astype(o_ref.dtype)


def _round_up(n, m):
    return ((n + m - 1) // m) * m


def _pick_tile_hw(hw_pad, c, itemsize, batch, *, max_tile_hw=8192,
                  vmem_budget_bytes=32 << 20, min_grid_steps=8):
    """Pick a lane-dense (multiple-of-128) pixel tile.

    Bounded by a VMEM budget for the double-buffered in/out streaming tiles,
    and shrunk when the grid would give too few steps for pipeline overlap.
    """
    # Per-pixel VMEM cost of the pipeline: 2 (in/out) * 2 (buffers) * C * itemsize.
    per_pixel = 4 * c * itemsize
    tile = vmem_budget_bytes // per_pixel
    tile = min(tile, max_tile_hw, hw_pad)
    tile = max(128, (tile // 128) * 128)

    # Guarantee enough grid steps per core so DMA/compute overlap (v7x: 2 TCs).
    n_tiles = pl.cdiv(hw_pad, tile)
    if batch * n_tiles < min_grid_steps:
        need_tiles = pl.cdiv(min_grid_steps, batch)
        tile_small = _round_up(pl.cdiv(hw_pad, need_tiles), 128)
        tile = max(128, min(tile, tile_small))

    # Prefer a tile that evenly divides hw_pad (no masked tail block). hw_pad is a
    # multiple of 128, so the loop always terminates at a valid divisor.
    t = tile
    while t > 128 and hw_pad % t != 0:
        t -= 128
    return t


def invertible_1x1_conv_forward(x, w, *, max_tile_hw=8192):
    """x: (B, C, H, W) float32, w: (C, C) float32. Returns (y NCHW, logdet scalar)."""
    B, C, H, W = x.shape
    HW = H * W
    itemsize = jnp.dtype(x.dtype).itemsize

    # Lane-dense pixel axis: pad H*W up to a multiple of 128 (no-op when already aligned).
    HW_pad = _round_up(HW, 128)
    x3 = x.reshape(B, C, HW)                        # free, contiguous reshape
    if HW_pad != HW:
        x3 = jnp.pad(x3, ((0, 0), (0, 0), (0, HW_pad - HW)))

    tile_hw = _pick_tile_hw(HW_pad, C, itemsize, B, max_tile_hw=max_tile_hw)
    n_hw_tiles = pl.cdiv(HW_pad, tile_hw)

    # Scoped VMEM: in + out streaming tiles (double-buffered) + weight, plus headroom.
    vmem_needed = 4 * C * tile_hw * itemsize + 2 * C * C * itemsize
    vmem_limit = int(min(max(vmem_needed + (4 << 20), 16 << 20), 100 << 20))

    cost = pl.CostEstimate(
        flops=2 * B * HW_pad * C * C,
        bytes_accessed=(2 * B * C * HW_pad + C * C) * itemsize,
        transcendentals=0,
    )

    y3 = pl.pallas_call(
        _conv1x1_kernel,
        out_shape=jax.ShapeDtypeStruct((B, C, HW_pad), x.dtype),
        grid=(B, n_hw_tiles),
        in_specs=[
            pl.BlockSpec((C, C), lambda b, t: (0, 0)),              # whole weight in VMEM (MXU)
            pl.BlockSpec((1, C, tile_hw), lambda b, t: (b, 0, t)),  # lane-dense pixel tile
        ],
        out_specs=pl.BlockSpec((1, C, tile_hw), lambda b, t: (b, 0, t)),
        compiler_params=pltpu.CompilerParams(
            dimension_semantics=("parallel", "parallel"),
            vmem_limit_bytes=vmem_limit,
        ),
        cost_estimate=cost,
    )(w, x3)

    if HW_pad != HW:
        y3 = y3[:, :, :HW]
    y = y3.reshape(B, C, H, W)                      # free reshape back to NCHW

    # TODO(synk): slogdet (LU-based determinant of the tiny CxC weight) has no
    # clean Pallas equivalent; computed in plain JAX glue.
    logdet = jnp.linalg.slogdet(w)[1] * H * W
    return y, logdet


if __name__ == "__main__":
    key = jax.random.PRNGKey(0)
    B, C, H, W = 2, 4, 16, 16

    # Deterministic parameter init mirroring the module's __init__:
    # w = orthogonalized (QR) random CxC matrix.
    kw, kx = jax.random.split(key)
    w0 = jax.random.normal(kw, (C, C), dtype=jnp.float32)
    w, _ = jnp.linalg.qr(w0)

    x = jax.random.normal(kx, (B, C, H, W), dtype=jnp.float32)

    y, logdet = invertible_1x1_conv_forward(x, w)
    y = jax.block_until_ready(y)
    logdet = jax.block_until_ready(logdet)

    # Sanity check against a plain-JAX reference (per-pixel matmul).
    y_ref = jnp.einsum("oc,bchw->bohw", w, x)
    logdet_ref = jnp.linalg.slogdet(w)[1] * H * W
    assert jnp.allclose(y, y_ref, atol=1e-5, rtol=1e-5), "conv output mismatch"
    assert jnp.allclose(logdet, logdet_ref, atol=1e-5, rtol=1e-5), "logdet mismatch"

    # Exercise the non-128-divisible H*W path (padding + slice-back).
    H2, W2 = 10, 10
    x2 = jax.random.normal(jax.random.PRNGKey(1), (B, C, H2, W2), dtype=jnp.float32)
    y2, logdet2 = invertible_1x1_conv_forward(x2, w)
    y2 = jax.block_until_ready(y2)
    y2_ref = jnp.einsum("oc,bchw->bohw", w, x2)
    assert jnp.allclose(y2, y2_ref, atol=1e-5, rtol=1e-5), "padded-HW output mismatch"
    assert jnp.allclose(logdet2, jnp.linalg.slogdet(w)[1] * H2 * W2,
                        atol=1e-5, rtol=1e-5), "padded-HW logdet mismatch"

    print("KERNEL_OK")
</pallas_src>

<mosaic_0001>
module attributes {stable_mosaic.version = 11 : i64} {
  func.func @_conv1x1_kernel(%arg0: i32, %arg1: i32, %arg2: memref<4x4xf32, #tpu.memory_space<vmem>>, %arg3: memref<1x4x128xf32, #tpu.memory_space<vmem>>, %arg4: memref<1x4x128xf32, #tpu.memory_space<vmem>>) attributes {dimension_semantics = [#tpu.dimension_semantics<parallel>, #tpu.dimension_semantics<parallel>], iteration_bounds = array<i64: 2, 2>, scalar_prefetch = 0 : i64, scratch_operands = 0 : i64, tpu.core_type = #tpu.core_type<tc>, window_params = [{pipeline_mode = #tpu.pipeline_mode<synchronous>, transform_indices = @transform_0, window_bounds = array<i64: 4, 4>}, {transform_indices = @transform_1, window_bounds = array<i64: 1, 4, 128>}, {transform_indices = @transform_2, window_bounds = array<i64: 1, 4, 128>}]} {
    %c0 = arith.constant 0 : index
    %c0_0 = arith.constant 0 : index
    %0 = vector.load %arg2[%c0, %c0_0] : memref<4x4xf32, #tpu.memory_space<vmem>>, vector<4x4xf32>
    %c0_1 = arith.constant 0 : index
    %c0_2 = arith.constant 0 : index
    %c0_3 = arith.constant 0 : index
    %1 = vector.load %arg3[%c0_1, %c0_2, %c0_3] : memref<1x4x128xf32, #tpu.memory_space<vmem>>, vector<1x4x128xf32>
    %2 = vector.shape_cast %1 : vector<1x4x128xf32> to vector<4x128xf32>
    %cst = arith.constant dense<0.000000e+00> : vector<4x128xf32>
    %3 = tpu.matmul %0, %2, %cst {dimension_numbers = #tpu.dot_dimension_numbers<[1], [0], [0], [1], [0, 0, 1, 1], [], []>} : vector<4x4xf32>, vector<4x128xf32>, vector<4x128xf32> -> vector<4x128xf32>
    %c0_4 = arith.constant 0 : index
    %c0_5 = arith.constant 0 : index
    %c0_6 = arith.constant 0 : index
    %4 = vector.load %arg4[%c0_4, %c0_5, %c0_6] : memref<1x4x128xf32, #tpu.memory_space<vmem>>, vector<1x4x128xf32>
    %5 = vector.shape_cast %4 : vector<1x4x128xf32> to vector<4x128xf32>
    %6 = vector.shape_cast %3 : vector<4x128xf32> to vector<1x4x128xf32>
    tpu.vector_store %arg4[%c0_4, %c0_5, %c0_6], %6 {strides = array<i32>} : memref<1x4x128xf32, #tpu.memory_space<vmem>>, vector<1x4x128xf32>,
    return
  }
  func.func @transform_0(%arg0: i32, %arg1: i32) -> (i32, i32) {
    %c0_i32 = arith.constant 0 : i32
    %c0_i32_0 = arith.constant 0 : i32
    %c0_i32_1 = arith.constant 0 : i32
    return %c0_i32, %c0_i32_0 : i32, i32
  }
  func.func @transform_1(%arg0: i32, %arg1: i32) -> (i32, i32, i32) {
    %c0_i32 = arith.constant 0 : i32
    %c0_i32_0 = arith.constant 0 : i32
    return %arg0, %c0_i32, %arg1 : i32, i32, i32
  }
  func.func @transform_2(%arg0: i32, %arg1: i32) -> (i32, i32, i32) {
    %c0_i32 = arith.constant 0 : i32
    %c0_i32_0 = arith.constant 0 : i32
    return %arg0, %c0_i32, %arg1 : i32, i32, i32
  }
}

</mosaic_0001>

<llo_original>
// kernel: tpu_custom_call.1
$region0: #{tpu_custom_call.1}
  #allocation0 [shape = 'u32[]', space=smem, size = 0x4, offset = 0x4, fixed_abs, tag = 'smem constant byte address 0x4 - core index']
  #allocation1 [shape = 'u32[72,128]{1,0:T(1,128)}', space=vmem, size = 0x9000, scoped, tag = 'internal scratch']
  %s0 = inlined_call_operand.hbm [shape: f32[4,4], index: 0, kind: input, shape index: {}]
  %s1 = inlined_call_operand.hbm [shape: f32[2,4,256], index: 1, kind: input, shape index: {}]
  %s2 = inlined_call_operand.hbm [shape: f32[2,4,256], index: 2, kind: output, shape index: {}]
  %s3 = sld [smem:[#allocation0]]
  $region49: #{tpu_custom_call.1} parent=0
    _
  %s5 = ssub.s32 1, %s3
  %s6 = scalar_select 0, %s5, %s3
  $region1: #{tpu_custom_call.1} parent=0
    #allocation2 [shape = 'u8[2048]{0}', space=vmem, size = 0x800, scoped, tag = 'input window, operand 0, single buffered']
    #allocation3 [shape = 's32[2]{0}', space=sflag, size = 0x8, scoped, tag = 'scoped memory for tpu_custom_call.1']
    #allocation4 [shape = 's32[2]{0}', space=sflag, size = 0x8, scoped, tag = 'scoped memory for tpu_custom_call.1']
    #allocation5 [shape = 'u8[4096]{0}', space=vmem, size = 0x1000, scoped, tag = 'input window, operand 1']
    #allocation6 [shape = 's32[2]{0}', space=sflag, size = 0x8, scoped, tag = 'scoped memory for tpu_custom_call.1']
    #allocation7 [shape = 'u8[4096]{0}', space=vmem, size = 0x1000, scoped, tag = 'output window, operand 0']
    %7 = vsyncpa [#allocation3], 0
    %8 = vsyncpa [#allocation6], 0
    %s9 = scalar_lea.sflag [#allocation6], 1
    %10 = vsyncpa %s9, 0
    %11 = vsyncpa [#allocation4], 0
    %s12 = scalar_lea.sflag [#allocation4], 1
    %13 = vsyncpa %s12, 0
    loop: start=0, step=1, limit=6
    $region2: #{tpu_custom_call.1} parent=1 // loop_pre_header
      _
    $region3: #{tpu_custom_call.1} parent=1 // loop_header
      %s15 = sphi 0, %s19
      %p16 = scmp.ge.s32.totalorder %s15, 6
      %s22 = sphi 0, %s34
      %s23 = sphi 0, %s30
      %s24 = sphi 0, %s22
      %s25 = sphi 0, %s23
      %s26 = sphi 0, %s24
      %s27 = sphi 0, %s25
      %s35 = sphi 0, %s35
      %s37 = sphi 0, %s35
      %s38 = sphi 0, %s37
      %s52 = sphi 0, %s38
      %s60 = sphi 0, %s62
      %s63 = sphi 0, %s60
      %s64 = sphi 0, %s63
      %s80 = sphi 0, %s64
      %s88 = sphi 0, %s90
      %s91 = sphi 0, %s88
      %s92 = sphi 0, %s91
      %s108 = sphi 0, %s92
    $region4: #{tpu_custom_call.1} parent=1 // loop_header_branch
      %18 = sbr.rel (%p16) target = $region8
    $region5: #{tpu_custom_call.1} parent=1 // loop_body
      %s20 = ssub.s32 %s15, 1
      %s21 = ssub.s32 %s15, 2
      %s28 = sadd.s32 1, %s23
      %p29 = scmp.ge.s32.totalorder %s28, 2
      %s30 = scalar_select %p29, 0, %s28
      %s31 = sadd.s32 1, %s22
      %s32 = scalar_select %p29, %s31, %s22
      %p33 = scmp.ge.s32.totalorder %s32, 2
      %s34 = scalar_select %p33, 0, %s32
      %s36 = sadd.s32 %s35, 1
      %p39 = scmp.eq.s32.totalorder %s15, 3
      %p40 = scmp.ne.s32.totalorder %s35, %s37
      %p41 = scmp.eq.s32.totalorder %s15, 0
      %p42 = por %p40, %p41
      %p43 = scmp.ne.s32.totalorder %s35, %s37
      %p44 = scmp.eq.s32.totalorder %s20, 3
      %p45 = por %p43, %p44
      %p46 = scmp.ne.s32.totalorder %s37, %s38
      %p47 = scmp.eq.s32.totalorder %s20, 0
      %p48 = por %p46, %p47
      %p49 = scmp.ne.s32.totalorder %s37, %s38
      %p50 = scmp.eq.s32.totalorder %s21, 3
      %p51 = por %p49, %p50
      %p53 = scmp.ne.s32.totalorder %s38, %s52
      %p54 = scmp.eq.s32.totalorder %s21, 0
      %p55 = por %p53, %p54
      %s56 = ssub.s32 %s22, %s34
      %s57 = ssub.s32 %s23, %s30
      %s58 = sor.u32 %s56, %s57
      %p59 = scmp.eq.s32.totalorder %s58, 0
      %s61 = sadd.s32 %s60, 1
      %s62 = scalar_select %p59, %s60, %s61
      %p65 = pneg %p59
      %p66 = scmp.eq.s32.totalorder %s15, 3
      %p67 = por %p65, %p66
      %p68 = scmp.ne.s32.totalorder %s60, %s63
      %p69 = scmp.eq.s32.totalorder %s15, 0
      %p70 = por %p68, %p69
      %p71 = scmp.ne.s32.totalorder %s60, %s63
      %p72 = scmp.eq.s32.totalorder %s20, 3
      %p73 = por %p71, %p72
      %p74 = scmp.ne.s32.totalorder %s63, %s64
      %p75 = scmp.eq.s32.totalorder %s20, 0
      %p76 = por %p74, %p75
      %p77 = scmp.ne.s32.totalorder %s63, %s64
      %p78 = scmp.eq.s32.totalorder %s21, 3
      %p79 = por %p77, %p78
      %p81 = scmp.ne.s32.totalorder %s64, %s80
      %p82 = scmp.eq.s32.totalorder %s21, 0
      %p83 = por %p81, %p82
      %s84 = ssub.s32 %s22, %s34
      %s85 = ssub.s32 %s23, %s30
      %s86 = sor.u32 %s84, %s85
      %p87 = scmp.eq.s32.totalorder %s86, 0
      %s89 = sadd.s32 %s88, 1
      %s90 = scalar_select %p87, %s88, %s89
      %p93 = pneg %p87
      %p94 = scmp.eq.s32.totalorder %s15, 3
      %p95 = por %p93, %p94
      %p96 = scmp.ne.s32.totalorder %s88, %s91
      %p97 = scmp.eq.s32.totalorder %s15, 0
      %p98 = por %p96, %p97
      %p99 = scmp.ne.s32.totalorder %s88, %s91
      %p100 = scmp.eq.s32.totalorder %s20, 3
      %p101 = por %p99, %p100
      %p102 = scmp.ne.s32.totalorder %s91, %s92
      %p103 = scmp.eq.s32.totalorder %s20, 0
      %p104 = por %p102, %p103
      %p105 = scmp.ne.s32.totalorder %s91, %s92
      %p106 = scmp.eq.s32.totalorder %s21, 3
      %p107 = por %p105, %p106
      %p109 = scmp.ne.s32.totalorder %s92, %s108
      %p110 = scmp.eq.s32.totalorder %s21, 0
      %p111 = por %p109, %p110
      %p112 = scmp.le.s32.totalorder 1, %s15
      %p113 = scmp.lt.s32.totalorder %s15, 5
      %p114 = pnand %p112, %p113
      %p115 = pneg %p114
      // Predicated region
      $region9: #{tpu_custom_call.1} parent=5 // pred_check
        _
      $region10: #{tpu_custom_call.1} parent=5 // pred_check_branch
        %117 = sbr.rel (%p114) target = $region12
      $region11: #{tpu_custom_call.1} parent=5 // pred_region
        %s118 = ssub.s32 %s15, 1
        // Predicated region
        $region13: #{tpu_custom_call.1} parent=11 // pred_check
          %p119 = pneg %p48
        $region14: #{tpu_custom_call.1} parent=11 // pred_check_branch
          %121 = sbr.rel (%p119) target = $region16
        $region15: #{tpu_custom_call.1} parent=11 // pred_region
          %123 = vsyncadd [#allocation3], 0
          %s125 = sshll.u32 %s0, 4
          %s126 = int_to_ptr.hbm [resolvable:$true] %s125
          %s127 = sshll.u32 [#allocation2], 4
          %s128 = int_to_ptr.vmem [resolvable:$true] %s127
          %130 = dma.hbm_to_vmem [thread:$0]  %s126, 64, %s128, [#allocation3]
        $region16: #{tpu_custom_call.1} parent=11 // pred_fallthru
          _
      $region12: #{tpu_custom_call.1} parent=5 // pred_fallthru
        _
      %p131 = scmp.lt.s32.totalorder %s15, 4
      // Predicated region
      $region17: #{tpu_custom_call.1} parent=5 // pred_check
        %p132 = pneg %p131
      $region18: #{tpu_custom_call.1} parent=5 // pred_check_branch
        %134 = sbr.rel (%p132) target = $region20
      $region19: #{tpu_custom_call.1} parent=5 // pred_region
        // Predicated region
        $region21: #{tpu_custom_call.1} parent=19 // pred_check
          %p135 = pneg %p70
        $region22: #{tpu_custom_call.1} parent=19 // pred_check_branch
          %137 = sbr.rel (%p135) target = $region24
        $region23: #{tpu_custom_call.1} parent=19 // pred_region
          %s138 = sand.u32 %s60, 1
          %s139 = scalar_lea.sflag [#allocation6], %s138
          %s140 = sand.u32 %s60, 1
          %s141 = smul.addr %s140, 4
          %s142 = scalar_lea.vmem [#allocation5], %s141
          %144 = vsyncadd %s139, 0
          %s145 = smul.addr %s22, 2
          %s146 = sadd.s32 %s23, %s145
          %s147 = smul.addr %s146, 4
          %s148 = scalar_lea.hbm %s1, %s147
          %s150 = sshll.u32 %s148, 4
          %s151 = int_to_ptr.hbm [resolvable:$true] %s150
          %s152 = sshll.u32 %s142, 4
          %s153 = int_to_ptr.vmem [resolvable:$true] %s152
          %155 = dma.hbm_to_vmem [thread:$0]  %s151, 64, %s153, %s139
        $region24: #{tpu_custom_call.1} parent=19 // pred_fallthru
          _
      $region20: #{tpu_custom_call.1} parent=5 // pred_fallthru
        _
      %p156 = scmp.le.s32.totalorder 1, %s15
      %p157 = scmp.lt.s32.totalorder %s15, 5
      %p158 = pnand %p156, %p157
      %p159 = pneg %p158
      // Predicated region
      $region25: #{tpu_custom_call.1} parent=5 // pred_check
        _
      $region26: #{tpu_custom_call.1} parent=5 // pred_check_branch
        %161 = sbr.rel (%p158) target = $region28
      $region27: #{tpu_custom_call.1} parent=5 // pred_region
        %s162 = ssub.s32 %s15, 1
        // Predicated region
        $region29: #{tpu_custom_call.1} parent=27 // pred_check
          %p163 = pneg %p48
        $region30: #{tpu_custom_call.1} parent=27 // pred_check_branch
          %165 = sbr.rel (%p163) target = $region32
        $region31: #{tpu_custom_call.1} parent=27 // pred_region
          %167 = dma.done [#allocation3], 64
        $region32: #{tpu_custom_call.1} parent=27 // pred_fallthru
          _
        %s168 = sand.u32 %s63, 1
        %s169 = scalar_lea.sflag [#allocation6], %s168
        %s170 = sand.u32 %s63, 1
        %s171 = smul.addr %s170, 4
        %s172 = scalar_lea.vmem [#allocation5], %s171
        // Predicated region
        $region33: #{tpu_custom_call.1} parent=27 // pred_check
          %p173 = pneg %p76
        $region34: #{tpu_custom_call.1} parent=27 // pred_check_branch
          %175 = sbr.rel (%p173) target = $region36
        $region35: #{tpu_custom_call.1} parent=27 // pred_region
          %177 = dma.done %s169, 64
        $region36: #{tpu_custom_call.1} parent=27 // pred_fallthru
          _
        %p178 = pneg %p48
        %p179 = pneg %p45
        %s180 = sand.u32 %s63, 1
        %s181 = scalar_lea.sflag [#allocation6], %s180
        %s182 = sand.u32 %s63, 1
        %s183 = smul.addr %s182, 4
        %s184 = scalar_lea.vmem [#allocation5], %s183
        %p185 = pneg %p76
        %p186 = pneg %p73
        %p187 = pneg %p104
        %p188 = pneg %p101
        %s189 = sand.u32 %s91, 1
        %s190 = scalar_lea.sflag [#allocation4], %s189
        %s191 = sand.u32 %s91, 1
        %s192 = smul.addr %s191, 4
        %s193 = scalar_lea.vmem [#allocation7], %s192
        %v194 = vld [vmem:[#allocation2] sm:$0xf]
        %v195 = vld [vmem:[%s172] sm:$0xf]
        %vm196 = vcmask 31744
        %v198 = vsel %vm196, %v194, 0
        %vm200 = vcmask 1043456
        %v202 = vsel %vm200, %v195, 0
        %204 = vmatpush.msra.mxu0 0.0
        %205 = vmatpush.msra.mxu0 0.0
        %206 = vmatpush.msra.mxu0 0.0
        %207 = vmatpush.msra.mxu0 0.0
        %208 = vmatpush.msra.mxu0 0.0
        %209 = vmatpush.msra.mxu0 0.0
        %210 = vmatpush.msra.mxu0 0.0
        %211 = vmatpush.msra.mxu0 0.0
        %212 = vmatpush.msra.mxu0 0.0
        %213 = vmatpush.msra.mxu0 0.0
        %214 = vmatpush.msra.mxu0 0.0
        %215 = vmatpush.msra.mxu0 0.0
        %216 = vmatpush.msra.mxu0 0.0
        %217 = vmatpush.msra.mxu0 0.0
        %218 = vmatpush.msra.mxu0 0.0
        %219 = vmatpush.msra.mxu0 %v202
        %220 = vmatmul.f32.gmra.mxu0 %v198
        %v221 = vpop.f32.mrf.mxu0
        %v222 = vadd.f32 0.0, %v221
        %223 = vdwg.mxu0
        %224 = vst [vmem:[%s193] sm:$0xf] %v222
        %s225 = sand.u32 %s91, 1
        %s226 = scalar_lea.sflag [#allocation4], %s225
        %s227 = sand.u32 %s91, 1
        %s228 = smul.addr %s227, 4
        %s229 = scalar_lea.vmem [#allocation7], %s228
        // Predicated region
        $region37: #{tpu_custom_call.1} parent=27 // pred_check
          %p230 = pneg %p101
        $region38: #{tpu_custom_call.1} parent=27 // pred_check_branch
          %232 = sbr.rel (%p230) target = $region40
        $region39: #{tpu_custom_call.1} parent=27 // pred_region
          %234 = vsyncadd %s226, 0
          %s235 = smul.addr %s24, 2
          %s236 = sadd.s32 %s25, %s235
          %s237 = smul.addr %s236, 4
          %s238 = scalar_lea.hbm %s2, %s237
          %s240 = sshll.u32 %s229, 4
          %s241 = int_to_ptr.vmem [resolvable:$true] %s240
          %s242 = sshll.u32 %s238, 4
          %s243 = int_to_ptr.hbm [resolvable:$true] %s242
          %245 = dma.vmem_to_hbm [thread:$0]  %s241, 64, %s243, %s226
        $region40: #{tpu_custom_call.1} parent=27 // pred_fallthru
          _
      $region28: #{tpu_custom_call.1} parent=5 // pred_fallthru
        _
      %p246 = scmp.le.s32.totalorder 2, %s15
      // Predicated region
      $region41: #{tpu_custom_call.1} parent=5 // pred_check
        %p247 = pneg %p246
      $region42: #{tpu_custom_call.1} parent=5 // pred_check_branch
        %249 = sbr.rel (%p247) target = $region44
      $region43: #{tpu_custom_call.1} parent=5 // pred_region
        %s250 = ssub.s32 %s15, 2
        // Predicated region
        $region45: #{tpu_custom_call.1} parent=43 // pred_check
          %p251 = pneg %p107
        $region46: #{tpu_custom_call.1} parent=43 // pred_check_branch
          %253 = sbr.rel (%p251) target = $region48
        $region47: #{tpu_custom_call.1} parent=43 // pred_region
          %s254 = sand.u32 %s92, 1
          %s255 = scalar_lea.sflag [#allocation4], %s254
          %s256 = sand.u32 %s92, 1
          %s257 = smul.addr %s256, 4
          %s258 = scalar_lea.vmem [#allocation7], %s257
          %260 = dma.done %s255, 64
        $region48: #{tpu_custom_call.1} parent=43 // pred_fallthru
          _
      $region44: #{tpu_custom_call.1} parent=5 // pred_fallthru
        _
    $region6: #{tpu_custom_call.1} parent=1 // loop_footer
      %s19 = sadd.s32 1, %s15
    $region7: #{tpu_custom_call.1} parent=1 // loop_footer_branch
      %14 = sbr.rel target = $region3
    $region8: #{tpu_custom_call.1} parent=1 // loop_exit
      _
    %261 = vsyncpa [#allocation3], 1
    %s262 = scalar_lea.sflag [#allocation3], 1
    %263 = vsyncpa %s262, 1
    %264 = vsyncpa [#allocation6], 1
    %s265 = scalar_lea.sflag [#allocation6], 1
    %266 = vsyncpa %s265, 1
    %267 = vsyncpa [#allocation4], 1
    %s268 = scalar_lea.sflag [#allocation4], 1
    %269 = vsyncpa %s268, 1

</llo_original>
